<compile_context>
chip_gen: v7x
topology: tpu7x:2x2x1
jax: 0.10.0
libtpu: 0.0.40
codegen_flags: <defaults>
</compile_context>

<pallas_src>
import math
from functools import partial

import jax
import jax.numpy as jnp
from jax.experimental import pallas as pl
from jax.experimental.pallas import tpu as pltpu


def _pos_emb_kernel(pos_ref, scale_ref, phase_ref, group_ref, out_ref, *, R):
    """out[t, l] = sin(pos[t, group[l]] * scale[l] + phase[l]).

    pos_ref:   (TB, R) f32 -- R positions packed per 128-lane output row
    scale_ref: (1, L)  f32 -- div_term[(l % D) // 2], tiled R times
    phase_ref: (1, L)  f32 -- ((l % D) % 2) * pi/2,  tiled R times
    group_ref: (1, L)  i32 -- l // D (which packed position each lane uses)
    out_ref:   (TB, L) f32 -- L = R * D, lane-dense output slab
    """
    pos = pos_ref[...]                       # (TB, R)
    scale = scale_ref[...]                   # (1, L)
    phase = phase_ref[...]                   # (1, L)
    if R == 1:
        pos_lane = pos                       # (TB, 1): broadcasts over lanes
    else:
        group = group_ref[...]               # (1, L)
        pos_lane = jnp.where(group == 0, pos[:, 0:1], 0.0)
        for r in range(1, R):                # static, tiny (R = 128 // D)
            pos_lane = jnp.where(group == r, pos[:, r : r + 1], pos_lane)
    # Single transcendental per element: cos(x) == sin(x + pi/2).
    out_ref[...] = jnp.sin(pos_lane * scale + phase)


@partial(jax.jit, static_argnames=("embedding_dim",))
def sinusoidal_pos_emb_batched(positions, embedding_dim: int):
    """Batched Pallas SinusoidalPosEmb: (B,) positions -> (B, D) float32."""
    D = int(embedding_dim)
    assert D % 2 == 0, "SinusoidalPosEmb requires an even embedding_dim"
    positions = jnp.asarray(positions, dtype=jnp.float32).reshape(-1)
    B = positions.shape[0]

    # Lane packing: R positions share one 128-wide output row when possible.
    if 128 % D == 0:
        R = 128 // D
    else:
        R = 1  # TODO(synk): lane-dense packing only implemented when D | 128
    L = R * D

    # ---- trace-time constants (same math path as the reference) ----
    div_term = jnp.exp(
        jnp.arange(0, D, 2, dtype=jnp.float32) * (-(math.log(10000.0) / D))
    )                                                            # (D/2,)
    scale_d = jnp.repeat(div_term, 2)                            # (D,)
    phase_d = jnp.tile(jnp.asarray([0.0, math.pi / 2.0], jnp.float32), D // 2)
    scale_row = jnp.tile(scale_d, (R,))[None, :]                 # (1, L)
    phase_row = jnp.tile(phase_d, (R,))[None, :]                 # (1, L)
    group_row = (jnp.arange(L, dtype=jnp.int32) // D)[None, :]   # (1, L)

    # ---- pad the batch so packed rows tile evenly ----
    num_rows = -(-B // R)                                        # ceil(B / R)
    TB = 512 if num_rows >= 512 else -(-num_rows // 8) * 8       # rows / block
    num_rows_pad = -(-num_rows // TB) * TB
    B_pad = num_rows_pad * R
    pos_padded = jnp.zeros((B_pad,), jnp.float32).at[:B].set(positions)
    pos2d = pos_padded.reshape(num_rows_pad, R)

    out = pl.pallas_call(
        partial(_pos_emb_kernel, R=R),
        out_shape=jax.ShapeDtypeStruct((num_rows_pad, L), jnp.float32),
        grid=(num_rows_pad // TB,),
        in_specs=[
            pl.BlockSpec((TB, R), lambda i: (i, 0)),   # positions
            pl.BlockSpec((1, L), lambda i: (0, 0)),    # scale constant
            pl.BlockSpec((1, L), lambda i: (0, 0)),    # phase constant
            pl.BlockSpec((1, L), lambda i: (0, 0)),    # lane->position map
        ],
        out_specs=pl.BlockSpec((TB, L), lambda i: (i, 0)),
        compiler_params=pltpu.CompilerParams(dimension_semantics=("parallel",)),
    )(pos2d, scale_row, phase_row, group_row)

    # Free contiguous view: (num_rows_pad, R*D) -> (B_pad, D); trim padding.
    return out.reshape(B_pad, D)[:B]


def sinusoidal_pos_emb(position, embedding_dim: int):
    """PyTorch-module semantics: a single position -> (embedding_dim,) f32."""
    pos = jnp.asarray(position, dtype=jnp.float32).reshape(-1)
    return sinusoidal_pos_emb_batched(pos, embedding_dim)[0]


def _reference_batched(positions, embedding_dim: int):
    """Pure-JAX reference mirroring the PyTorch module exactly (per position)."""
    D = embedding_dim
    pos = jnp.asarray(positions, jnp.float32).reshape(-1, 1)          # (B, 1)
    div_term = jnp.exp(
        jnp.arange(0, D, 2, dtype=jnp.float32) * (-(math.log(10000.0) / D))
    )
    sin = jnp.sin(pos * div_term)                                     # (B, D/2)
    cos = jnp.cos(pos * div_term)
    return jnp.stack([sin, cos], axis=-1).reshape(-1, D)              # interleave


if __name__ == "__main__":
    D = 32  # hidden size (module __init__ argument)
    key = jax.random.PRNGKey(0)
    k_batch, k_single = jax.random.split(key)

    # Batched positions: the overhead-amortising fast path.
    positions = jax.random.randint(k_batch, (8,), 0, 100).astype(jnp.float32)
    out = jax.block_until_ready(sinusoidal_pos_emb_batched(positions, D))
    ref = _reference_batched(positions, D)
    assert out.shape == (8, D)
    assert out.dtype == jnp.float32
    # atol 1e-4: the pi/2-phase single-sin trick deviates from an exact cos by
    # only a few f32 ulps; this still catches any interleave / scale bug.
    assert jnp.allclose(out, ref, atol=1e-4, rtol=1e-4)

    # Single position: exact PyTorch-module semantics, (D,) output.
    p = int(jax.random.randint(k_single, (), 0, 100))
    out1 = jax.block_until_ready(sinusoidal_pos_emb(p, D))
    ref1 = _reference_batched(jnp.asarray([p], jnp.float32), D)[0]
    assert out1.shape == (D,)
    assert jnp.allclose(out1, ref1, atol=1e-4, rtol=1e-4)

    print("KERNEL_OK")
</pallas_src>

<mosaic_0001>
module attributes {stable_mosaic.version = 11 : i64} {
  func.func @_pos_emb_kernel(%arg0: i32, %arg1: memref<8x4xf32, #tpu.memory_space<vmem>>, %arg2: memref<1x128xf32, #tpu.memory_space<vmem>>, %arg3: memref<1x128xf32, #tpu.memory_space<vmem>>, %arg4: memref<1x128xi32, #tpu.memory_space<vmem>>, %arg5: memref<8x128xf32, #tpu.memory_space<vmem>>) attributes {dimension_semantics = [#tpu.dimension_semantics<parallel>], iteration_bounds = array<i64: 1>, scalar_prefetch = 0 : i64, scratch_operands = 0 : i64, tpu.core_type = #tpu.core_type<tc>, window_params = [{transform_indices = @transform_0, window_bounds = array<i64: 8, 4>}, {pipeline_mode = #tpu.pipeline_mode<synchronous>, transform_indices = @transform_1, window_bounds = array<i64: 1, 128>}, {pipeline_mode = #tpu.pipeline_mode<synchronous>, transform_indices = @transform_2, window_bounds = array<i64: 1, 128>}, {pipeline_mode = #tpu.pipeline_mode<synchronous>, transform_indices = @transform_3, window_bounds = array<i64: 1, 128>}, {transform_indices = @transform_4, window_bounds = array<i64: 8, 128>}]} {
    %c0 = arith.constant 0 : index
    %c0_0 = arith.constant 0 : index
    %0 = vector.load %arg1[%c0, %c0_0] : memref<8x4xf32, #tpu.memory_space<vmem>>, vector<8x4xf32>
    %c0_1 = arith.constant 0 : index
    %c0_2 = arith.constant 0 : index
    %1 = vector.load %arg2[%c0_1, %c0_2] : memref<1x128xf32, #tpu.memory_space<vmem>>, vector<1x128xf32>
    %c0_3 = arith.constant 0 : index
    %c0_4 = arith.constant 0 : index
    %2 = vector.load %arg3[%c0_3, %c0_4] : memref<1x128xf32, #tpu.memory_space<vmem>>, vector<1x128xf32>
    %c0_5 = arith.constant 0 : index
    %c0_6 = arith.constant 0 : index
    %3 = vector.load %arg4[%c0_5, %c0_6] : memref<1x128xi32, #tpu.memory_space<vmem>>, vector<1x128xi32>
    %c0_i32 = arith.constant 0 : i32
    %4 = vector.broadcast %c0_i32 : i32 to vector<1x128xi32>
    %5 = arith.cmpi eq, %3, %4 : vector<1x128xi32>
    %6 = vector.extract_strided_slice %0 {offsets = [0, 0], sizes = [8, 1], strides = [1, 1]} : vector<8x4xf32> to vector<8x1xf32>
    %cst = arith.constant 0.000000e+00 : f32
    %7 = vector.shape_cast %5 : vector<1x128xi1> to vector<1x128xi1>
    %8 = vector.broadcast %7 : vector<1x128xi1> to vector<8x128xi1>
    %9 = vector.shape_cast %6 : vector<8x1xf32> to vector<8x1xf32>
    %10 = vector.broadcast %9 : vector<8x1xf32> to vector<8x128xf32>
    %11 = vector.broadcast %cst : f32 to vector<8x128xf32>
    %12 = arith.select %8, %10, %11 : vector<8x128xi1>, vector<8x128xf32>
    %c1_i32 = arith.constant 1 : i32
    %13 = vector.broadcast %c1_i32 : i32 to vector<1x128xi32>
    %14 = arith.cmpi eq, %3, %13 : vector<1x128xi32>
    %15 = vector.extract_strided_slice %0 {offsets = [0, 1], sizes = [8, 1], strides = [1, 1]} : vector<8x4xf32> to vector<8x1xf32>
    %16 = vector.shape_cast %14 : vector<1x128xi1> to vector<1x128xi1>
    %17 = vector.broadcast %16 : vector<1x128xi1> to vector<8x128xi1>
    %18 = vector.shape_cast %15 : vector<8x1xf32> to vector<8x1xf32>
    %19 = vector.broadcast %18 : vector<8x1xf32> to vector<8x128xf32>
    %20 = arith.select %17, %19, %12 : vector<8x128xi1>, vector<8x128xf32>
    %c2_i32 = arith.constant 2 : i32
    %21 = vector.broadcast %c2_i32 : i32 to vector<1x128xi32>
    %22 = arith.cmpi eq, %3, %21 : vector<1x128xi32>
    %23 = vector.extract_strided_slice %0 {offsets = [0, 2], sizes = [8, 1], strides = [1, 1]} : vector<8x4xf32> to vector<8x1xf32>
    %24 = vector.shape_cast %22 : vector<1x128xi1> to vector<1x128xi1>
    %25 = vector.broadcast %24 : vector<1x128xi1> to vector<8x128xi1>
    %26 = vector.shape_cast %23 : vector<8x1xf32> to vector<8x1xf32>
    %27 = vector.broadcast %26 : vector<8x1xf32> to vector<8x128xf32>
    %28 = arith.select %25, %27, %20 : vector<8x128xi1>, vector<8x128xf32>
    %c3_i32 = arith.constant 3 : i32
    %29 = vector.broadcast %c3_i32 : i32 to vector<1x128xi32>
    %30 = arith.cmpi eq, %3, %29 : vector<1x128xi32>
    %31 = vector.extract_strided_slice %0 {offsets = [0, 3], sizes = [8, 1], strides = [1, 1]} : vector<8x4xf32> to vector<8x1xf32>
    %32 = vector.shape_cast %30 : vector<1x128xi1> to vector<1x128xi1>
    %33 = vector.broadcast %32 : vector<1x128xi1> to vector<8x128xi1>
    %34 = vector.shape_cast %31 : vector<8x1xf32> to vector<8x1xf32>
    %35 = vector.broadcast %34 : vector<8x1xf32> to vector<8x128xf32>
    %36 = arith.select %33, %35, %28 : vector<8x128xi1>, vector<8x128xf32>
    %37 = vector.broadcast %1 : vector<1x128xf32> to vector<8x128xf32>
    %38 = arith.mulf %36, %37 : vector<8x128xf32>
    %39 = vector.broadcast %2 : vector<1x128xf32> to vector<8x128xf32>
    %40 = arith.addf %38, %39 : vector<8x128xf32>
    %41 = math.sin %40 : vector<8x128xf32>
    %c0_7 = arith.constant 0 : index
    %c0_8 = arith.constant 0 : index
    %42 = vector.load %arg5[%c0_7, %c0_8] : memref<8x128xf32, #tpu.memory_space<vmem>>, vector<8x128xf32>
    tpu.vector_store %arg5[%c0_7, %c0_8], %41 {strides = array<i32>} : memref<8x128xf32, #tpu.memory_space<vmem>>, vector<8x128xf32>,
    return
  }
  func.func @transform_0(%arg0: i32) -> (i32, i32) {
    %c0_i32 = arith.constant 0 : i32
    %c0_i32_0 = arith.constant 0 : i32
    return %arg0, %c0_i32 : i32, i32
  }
  func.func @transform_1(%arg0: i32) -> (i32, i32) {
    %c0_i32 = arith.constant 0 : i32
    %c0_i32_0 = arith.constant 0 : i32
    %c0_i32_1 = arith.constant 0 : i32
    return %c0_i32, %c0_i32_0 : i32, i32
  }
  func.func @transform_2(%arg0: i32) -> (i32, i32) {
    %c0_i32 = arith.constant 0 : i32
    %c0_i32_0 = arith.constant 0 : i32
    %c0_i32_1 = arith.constant 0 : i32
    return %c0_i32, %c0_i32_0 : i32, i32
  }
  func.func @transform_3(%arg0: i32) -> (i32, i32) {
    %c0_i32 = arith.constant 0 : i32
    %c0_i32_0 = arith.constant 0 : i32
    %c0_i32_1 = arith.constant 0 : i32
    return %c0_i32, %c0_i32_0 : i32, i32
  }
  func.func @transform_4(%arg0: i32) -> (i32, i32) {
    %c0_i32 = arith.constant 0 : i32
    %c0_i32_0 = arith.constant 0 : i32
    return %arg0, %c0_i32 : i32, i32
  }
}

</mosaic_0001>

<llo_original>
// kernel: tile.16
$region0: #{tile.16}
  %s0 = inlined_call_operand.vmem [shape: f32[16,2], index: 0, kind: input, shape index: {}]
  %s1 = inlined_call_operand.vmem [shape: f32[32], index: 1, kind: output, shape index: {}]
  $region1: #{tile.16} parent=0
    #allocation0 [shape = 'u8[4096]{0}', space=vmem, size = 0x1000, scoped, tag = 'scoped mem for output reshape']
    %v2 = vld [vmem:[%s0] sm:$0x1]
    %vm3 = vcmask 15360
    %4 = vst.msk [vmem:[#allocation0] sm:$0x1] %vm3, %v2
    %s5 = scalar_lea.vmem %s0, 15
    %v6 = vld [vmem:[%s5] sm:$0x1]
    %7 = vrot.lane.b32.xlu0 %v6, 30
    %v8 = vpop.permute.xlu0 %7
    %vm9 = vcmask 261360
    %10 = vst.msk [vmem:[#allocation0] sm:$0x1] %vm9, %v8
    %s11 = scalar_lea.vmem %s0, 14
    %v12 = vld [vmem:[%s11] sm:$0x1]
    %13 = vrot.lane.b32.xlu0 %v12, 28
    %v14 = vpop.permute.xlu0 %13
    %vm15 = vcmask 244960
    %16 = vst.msk [vmem:[#allocation0] sm:$0x1] %vm15, %v14
    %s17 = scalar_lea.vmem %s0, 13
    %v18 = vld [vmem:[%s17] sm:$0x1]
    %19 = vrot.lane.b32.xlu0 %v18, 26
    %v20 = vpop.permute.xlu0 %19
    %vm21 = vcmask 228560
    %22 = vst.msk [vmem:[#allocation0] sm:$0x1] %vm21, %v20
    %s23 = scalar_lea.vmem %s0, 12
    %v24 = vld [vmem:[%s23] sm:$0x1]
    %25 = vrot.lane.b32.xlu0 %v24, 24
    %v26 = vpop.permute.xlu0 %25
    %vm27 = vcmask 212160
    %28 = vst.msk [vmem:[#allocation0] sm:$0x1] %vm27, %v26
    %s29 = scalar_lea.vmem %s0, 11
    %v30 = vld [vmem:[%s29] sm:$0x1]
    %31 = vrot.lane.b32.xlu0 %v30, 22
    %v32 = vpop.permute.xlu0 %31
    %vm33 = vcmask 195760
    %34 = vst.msk [vmem:[#allocation0] sm:$0x1] %vm33, %v32
    %s35 = scalar_lea.vmem %s0, 10
    %v36 = vld [vmem:[%s35] sm:$0x1]
    %37 = vrot.lane.b32.xlu0 %v36, 20
    %v38 = vpop.permute.xlu0 %37
    %vm39 = vcmask 179360
    %40 = vst.msk [vmem:[#allocation0] sm:$0x1] %vm39, %v38
    %s41 = scalar_lea.vmem %s0, 9
    %v42 = vld [vmem:[%s41] sm:$0x1]
    %43 = vrot.lane.b32.xlu0 %v42, 18
    %v44 = vpop.permute.xlu0 %43
    %vm45 = vcmask 162960
    %46 = vst.msk [vmem:[#allocation0] sm:$0x1] %vm45, %v44
    %s47 = scalar_lea.vmem %s0, 8
    %v48 = vld [vmem:[%s47] sm:$0x1]
    %49 = vrot.lane.b32.xlu0 %v48, 16
    %v50 = vpop.permute.xlu0 %49
    %vm51 = vcmask 146560
    %52 = vst.msk [vmem:[#allocation0] sm:$0x1] %vm51, %v50
    %s53 = scalar_lea.vmem %s0, 7
    %v54 = vld [vmem:[%s53] sm:$0x1]
    %55 = vrot.lane.b32.xlu0 %v54, 14
    %v56 = vpop.permute.xlu0 %55
    %vm57 = vcmask 130160
    %58 = vst.msk [vmem:[#allocation0] sm:$0x1] %vm57, %v56
    %s59 = scalar_lea.vmem %s0, 6
    %v60 = vld [vmem:[%s59] sm:$0x1]
    %61 = vrot.lane.b32.xlu0 %v60, 12
    %v62 = vpop.permute.xlu0 %61
    %vm63 = vcmask 113760
    %64 = vst.msk [vmem:[#allocation0] sm:$0x1] %vm63, %v62
    %s65 = scalar_lea.vmem %s0, 5
    %v66 = vld [vmem:[%s65] sm:$0x1]
    %67 = vrot.lane.b32.xlu0 %v66, 10
    %v68 = vpop.permute.xlu0 %67
    %vm69 = vcmask 97360
    %70 = vst.msk [vmem:[#allocation0] sm:$0x1] %vm69, %v68
    %s71 = scalar_lea.vmem %s0, 4
    %v72 = vld [vmem:[%s71] sm:$0x1]
    %73 = vrot.lane.b32.xlu0 %v72, 8
    %v74 = vpop.permute.xlu0 %73
    %vm75 = vcmask 80960
    %76 = vst.msk [vmem:[#allocation0] sm:$0x1] %vm75, %v74
    %s77 = scalar_lea.vmem %s0, 3
    %v78 = vld [vmem:[%s77] sm:$0x1]
    %79 = vrot.lane.b32.xlu0 %v78, 6
    %v80 = vpop.permute.xlu0 %79
    %vm81 = vcmask 64560
    %82 = vst.msk [vmem:[#allocation0] sm:$0x1] %vm81, %v80
    %s83 = scalar_lea.vmem %s0, 2
    %v84 = vld [vmem:[%s83] sm:$0x1]
    %85 = vrot.lane.b32.xlu0 %v84, 4
    %v86 = vpop.permute.xlu0 %85
    %vm87 = vcmask 48160
    %88 = vst.msk [vmem:[#allocation0] sm:$0x1] %vm87, %v86
    %s89 = scalar_lea.vmem %s0, 1
    %v90 = vld [vmem:[%s89] sm:$0x1]
    %91 = vrot.lane.b32.xlu0 %v90, 2
    %v92 = vpop.permute.xlu0 %91
    %vm93 = vcmask 31760
    %94 = vst.msk [vmem:[#allocation0] sm:$0x1] %vm93, %v92
    %s96 = sshllo.u32 0, 1
    %v98 = vld [vmem:[#allocation0] sm:%s96]
    %s99 = sshllo.u32 0, 1
    %100 = vst [vmem:[%s1] sm:%s99] %v98

// kernel: tile.17
$region0: #{tile.17}
  #allocation0 [shape = 's32[1]{0}', space=sflag, size = 0x4, scoped, tag = 'scoped memory for tile.17']
  %s0 = inlined_call_operand.vmem [shape: f32[32], index: 0, kind: input, shape index: {}]
  %s1 = inlined_call_operand.vmem [shape: f32[4,32], index: 1, kind: output, shape index: {}]
  // Predicated region
  $region2: #{tile.17} parent=0 // pred_check
    _
  $region3: #{tile.17} parent=0 // pred_check_branch
    %3 = sbr.rel (0) target = $region5
  $region4: #{tile.17} parent=0 // pred_region
    _
  $region5: #{tile.17} parent=0 // pred_fallthru
    _
  %v4 = vld [vmem:[%s0] ss:$0 sm:$0xff]
  %5 = vst [vmem:[%s1] sm:$0xf] %v4

// kernel: tile.18
$region0: #{tile.18}
  %s0 = inlined_call_operand.vmem [shape: f32[4,32], index: 0, kind: input, shape index: {}]
  %s1 = inlined_call_operand.vmem [shape: f32[1,128], index: 1, kind: output, shape index: {}]
  $region1: #{tile.18} parent=0
    #allocation0 [shape = 'u8[4096]{0}', space=vmem, size = 0x1000, scoped, tag = 'scoped mem for output reshape']
    #allocation1 [shape = 'u8[4096]{0}', space=vmem, size = 0x1000, scoped, tag = 'scoped mem for input reshape']
    %s3 = sshllo.u32 0, 4
    %v4 = vld [vmem:[%s0] sm:%s3]
    %5 = vst [vmem:[#allocation1] sm:%s3] %v4
    %v6 = vld [vmem:[#allocation1] sm:$0x1]
    %vm7 = vcmask 261120
    %8 = vst.msk [vmem:[#allocation0] sm:$0x1] %vm7, %v6
    %s9 = scalar_lea.vmem [#allocation1], 3
    %v10 = vld [vmem:[%s9] sm:$0x1]
    %11 = vrot.lane.b32.xlu0 %v10, 96
    %v12 = vpop.permute.xlu0 %11
    %vm13 = vcmask 1048320
    %14 = vst.msk [vmem:[#allocation0] sm:$0x1] %vm13, %v12
    %s15 = scalar_lea.vmem [#allocation1], 2
    %v16 = vld [vmem:[%s15] sm:$0x1]
    %17 = vrot.lane.b32.xlu0 %v16, 64
    %v18 = vpop.permute.xlu0 %17
    %vm19 = vcmask 785920
    %20 = vst.msk [vmem:[#allocation0] sm:$0x1] %vm19, %v18
    %s21 = scalar_lea.vmem [#allocation1], 1
    %v22 = vld [vmem:[%s21] sm:$0x1]
    %23 = vrot.lane.b32.xlu0 %v22, 32
    %v24 = vpop.permute.xlu0 %23
    %vm25 = vcmask 523520
    %26 = vst.msk [vmem:[#allocation0] sm:$0x1] %vm25, %v24
    %s28 = sshllo.u32 0, 1
    %v30 = vld [vmem:[#allocation0] sm:%s28]
    %s31 = sshllo.u32 0, 1
    %32 = vst [vmem:[%s1] sm:%s31] %v30

// kernel: tile.14
$region0: #{tile.14}
  #allocation0 [shape = 's32[1]{0}', space=sflag, size = 0x4, scoped, tag = 'scoped memory for tile.14']
  %s0 = inlined_call_operand.vmem [shape: f32[2], index: 0, kind: input, shape index: {}]
  %s1 = inlined_call_operand.vmem [shape: f32[16,2], index: 1, kind: output, shape index: {}]
  // Predicated region
  $region2: #{tile.14} parent=0 // pred_check
    _
  $region3: #{tile.14} parent=0 // pred_check_branch
    %3 = sbr.rel (0) target = $region5
  $region4: #{tile.14} parent=0 // pred_region
    _
  $region5: #{tile.14} parent=0 // pred_fallthru
    _
  %v4 = vld [vmem:[%s0] ss:$0 sm:$0xff]
  %5 = vst [vmem:[%s1] sm:$0xff] %v4
  %s6 = scalar_lea.vmem %s1, 8
  %7 = vst [vmem:[%s6] sm:$0xff] %v4

// kernel: sinusoidal_pos_emb_batched.1
$region0: #{sinusoidal_pos_emb_batched.1}
  #allocation0 [shape = 'u32[]', space=smem, size = 0x4, offset = 0x4, fixed_abs, tag = 'smem constant byte address 0x4 - core index']
  #allocation1 [shape = 'u32[144,128]{1,0:T(1,128)}', space=vmem, size = 0x12000, scoped, tag = 'internal scratch']
  %s0 = inlined_call_operand.vmem [shape: f32[8,4], index: 0, kind: input, shape index: {}]
  %s1 = inlined_call_operand.vmem [shape: f32[1,128], index: 1, kind: input, shape index: {}]
  %s2 = inlined_call_operand.vmem [shape: f32[1,128], index: 2, kind: input, shape index: {}]
  %s3 = inlined_call_operand.vmem [shape: s32[1,128], index: 3, kind: input, shape index: {}]
  %s4 = inlined_call_operand.vmem [shape: f32[8,128], index: 4, kind: output, shape index: {}]
  %s5 = sld [smem:[#allocation0]]
  $region26: #{sinusoidal_pos_emb_batched.1} parent=0
    _
  %s7 = ssub.s32 1, %s5
  %s8 = scalar_select 0, %s7, %s5
  // Predicated region
  $region2: #{sinusoidal_pos_emb_batched.1} parent=0 // pred_check
    _
  $region3: #{sinusoidal_pos_emb_batched.1} parent=0 // pred_check_branch
    %10 = sbr.rel (0) target = $region5
  $region4: #{sinusoidal_pos_emb_batched.1} parent=0 // pred_region
    _
  $region5: #{sinusoidal_pos_emb_batched.1} parent=0 // pred_fallthru
    _
  // Predicated region
  $region6: #{sinusoidal_pos_emb_batched.1} parent=0 // pred_check
    _
  $region7: #{sinusoidal_pos_emb_batched.1} parent=0 // pred_check_branch
    %12 = sbr.rel (0) target = $region9
  $region8: #{sinusoidal_pos_emb_batched.1} parent=0 // pred_region
    _
  $region9: #{sinusoidal_pos_emb_batched.1} parent=0 // pred_fallthru
    _
  // Predicated region
  $region10: #{sinusoidal_pos_emb_batched.1} parent=0 // pred_check
    _
  $region11: #{sinusoidal_pos_emb_batched.1} parent=0 // pred_check_branch
    %14 = sbr.rel (0) target = $region13
  $region12: #{sinusoidal_pos_emb_batched.1} parent=0 // pred_region
    _
  $region13: #{sinusoidal_pos_emb_batched.1} parent=0 // pred_fallthru
    _
  // Predicated region
  $region14: #{sinusoidal_pos_emb_batched.1} parent=0 // pred_check
    _
  $region15: #{sinusoidal_pos_emb_batched.1} parent=0 // pred_check_branch
    %16 = sbr.rel (0) target = $region17
  $region16: #{sinusoidal_pos_emb_batched.1} parent=0 // pred_region
    _
  $region17: #{sinusoidal_pos_emb_batched.1} parent=0 // pred_fallthru
    _
  %v17 = vld [vmem:[%s0] sm:$0xff]
  %v18 = vld [vmem:[%s1] sm:$0x1]
  %v19 = vld [vmem:[%s2] sm:$0x1]
  %v20 = vld [vmem:[%s3] sm:$0x1]
  %vm21 = vcmp.eq.s32.totalorder %v20, 0
  %v22 = vsel %vm21, 1, 0
  %v23 = vlaneseq
  %v24 = vshrl.u32 %v23, 7
  %v25 = vsub.s32 0, %v24
  %v26 = vrot.slane %v22, %v25
  %vm27 = vcmp.eq.s32.totalorder %v26, 1
  %29 = vset.pattern.permute.xlu0 0
  %30 = vperm.xlu0 %29, %v17
  %v31 = vpop.permute.xlu0 %30
  %v33 = vsel %vm27, %v31, 0.0
  %vm34 = vcmp.eq.s32.totalorder %v20, 1
  %v35 = vsel %vm34, 1, 0
  %v36 = vlaneseq
  %v37 = vshrl.u32 %v36, 7
  %v38 = vsub.s32 0, %v37
  %v39 = vrot.slane %v35, %v38
  %vm40 = vcmp.eq.s32.totalorder %v39, 1
  %41 = vset.pattern.permute.xlu0 1
  %42 = vperm.xlu0 %41, %v17
  %v43 = vpop.permute.xlu0 %42
  %v45 = vsel %vm40, %v43, %v33
  %vm46 = vcmp.eq.s32.totalorder %v20, 2
  %v47 = vsel %vm46, 1, 0
  %v48 = vlaneseq
  %v49 = vshrl.u32 %v48, 7
  %v50 = vsub.s32 0, %v49
  %v51 = vrot.slane %v47, %v50
  %vm52 = vcmp.eq.s32.totalorder %v51, 1
  %53 = vset.pattern.permute.xlu0 2
  %54 = vperm.xlu0 %53, %v17
  %v55 = vpop.permute.xlu0 %54
  %v57 = vsel %vm52, %v55, %v45
  %vm58 = vcmp.eq.s32.totalorder %v20, 3
  %v59 = vsel %vm58, 1, 0
  %v60 = vlaneseq
  %v61 = vshrl.u32 %v60, 7
  %v62 = vsub.s32 0, %v61
  %v63 = vrot.slane %v59, %v62
  %vm64 = vcmp.eq.s32.totalorder %v63, 1
  %65 = vset.pattern.permute.xlu0 3
  %66 = vperm.xlu0 %65, %v17
  %v67 = vpop.permute.xlu0 %66
  %v69 = vsel %vm64, %v67, %v57
  %v71 = vlaneseq
  %v72 = vshrl.u32 %v71, 7
  %v73 = vsub.s32 0, %v72
  %v74 = vrot.slane %v18, %v73
  %v76 = vmul.f32 %v69, %v74
  %v78 = vlaneseq
  %v79 = vshrl.u32 %v78, 7
  %v80 = vsub.s32 0, %v79
  %v81 = vrot.slane %v19, %v80
  %v83 = vadd.f32 %v76, %v81
  %v84 = vand.u32 2147483647, %v83
  %vm85 = vcmp.le.f32.partialorder %v84, 0.7853982
  %vm86 = vcmp.lt.s32.totalorder %v83, 0
  %v87 = vand.u32 %v83, 2139095040
  %v88 = vshrl.u32 %v87, 23
  %v89 = vsub.s32 %v88, 127
  %v90 = vand.u32 2147483647, %v83
  %v91 = vand.u32 %v90, 8388607
  %v92 = vor.u32 %v91, 8388608
  %v93 = vsub.s32 0, %v92
  %v94 = vadd.s32 %v89, 1
  %vm95 = vcmp.gt.s32.totalorder %v94, 0
  %v96 = vsel %vm95, %v94, 0
  %v97 = vshrl.u32 %v96, 5
  %v98 = vand.u32 %v96, 31
  %v99 = vsub.s32 32, %v98
  %v100 = vshrl.u32 683565275, %v99
  %v101 = vshll.u32 683565275, %v98
  %v102 = vshrl.u32 2475754826, %v99
  %v103 = vor.u32 %v101, %v102
  %v104 = vshll.u32 2475754826, %v98
  %v105 = vshrl.u32 2131351028, %v99
  %v106 = vor.u32 %v104, %v105
  %v107 = vshll.u32 2131351028, %v98
  %v108 = vshrl.u32 2102212464, %v99
  %v109 = vor.u32 %v107, %v108
  %v110 = vshll.u32 2102212464, %v98
  %v111 = vshrl.u32 920167782, %v99
  %v112 = vor.u32 %v110, %v111
  %v113 = vshll.u32 920167782, %v98
  %v114 = vshrl.u32 1326507024, %v99
  %v115 = vor.u32 %v113, %v114
  %vm116 = vcmp.lt.s32.totalorder %v97, 1
  %vm117 = vcmp.lt.s32.totalorder %v97, 2
  %vm118 = vcmp.lt.s32.totalorder %v97, 3
  %vm119 = vcmp.lt.s32.totalorder %v97, 4
  %v120 = vsel %vm116, %v100, %v103
  %v121 = vsel %vm119, %v109, 2102212464
  %v122 = vsel %vm118, %v106, %v121
  %v123 = vsel %vm117, %v120, %v122
  %v124 = vsel %vm116, %v103, %v106
  %v125 = vsel %vm119, %v112, 920167782
  %v126 = vsel %vm118, %v109, %v125
  %v127 = vsel %vm117, %v124, %v126
  %v128 = vsel %vm116, %v106, %v109
  %v129 = vsel %vm119, %v115, 1326507024
  %v130 = vsel %vm118, %v112, %v129
  %v131 = vsel %vm117, %v128, %v130
  %v132 = vshll.u32 %v92, 8
  %v133 = vmul.u32.u64.compose %v132, %v131
  %v134 = vextract.low.u32 %v133
  %v135 = vextract.high.u32 %v133
  %v136 = vmul.u32.u64.compose %v132, %v127
  %v137 = vextract.low.u32 %v136
  %v138 = vextract.high.u32 %v136
  %v139 = vmul.u32 %v132, %v123
  %v140 = vadd.s32 %v135, %v137
  %vm141 = vc.u32 %v135, %v137
  %v142 = vadd.s32 %v138, 1
  %v143 = vsel %vm141, %v142, %v138
  %v144 = vadd.s32 %v139, %v143
  %v145 = vadd.s32 %v144, 536870912
  %v146 = vshrl.u32 %v145, 30
  %v147 = vshll.u32 %v146, 30
  %v148 = vsub.s32 %v144, %v147
  %vm149 = vcmp.lt.s32.totalorder %v148, 0
  %v150 = vsub.s32 0, %v148
  %v151 = vsel %vm149, %v150, %v148
  %v152 = vclz %v151
  %v153 = vsub.s32 %v152, 2
  %vm154 = vcmp.gt.s32.totalorder 0, %v153
  %v155 = vsel %vm154, 0, %v153
  %v156 = vsub.s32 32, %v155
  %v157 = vshll.u32 %v148, %v155
  %v158 = vshrl.u32 %v140, %v156
  %v159 = vor.u32 %v157, %v158
  %v160 = vsub.s32 4294967266, %v155
  %v161 = vadd.s32 %v160, 127
  %v162 = vshll.u32 %v161, 23
  %v163 = vor.u32 4788187, %v162
  %v164 = vand.u32 2147483647, %v163
  %v166 = vcvt.s32.f32 %v159
  %v167 = vmul.f32 %v166, %v164
  %v168 = vxor.u32 %v167, 2147483648
  %v169 = vsel %vm86, %v168, %v167
  %v170 = vsub.s32 4, %v146
  %v171 = vsel %vm86, %v170, %v146
  %v172 = vsel %vm85, %v83, %v169
  %v173 = vsel %vm85, 0, %v171
  %v174 = vcosq.f32.pop %v172
  %v175 = vsinq.f32.pop %v172
  %vm176 = vweird.f32 %v83
  %v177 = vadd.s32 %v173, 3
  %v178 = vand.u32 %v177, 3
  %vm179 = vcmp.lt.s32.totalorder %v178, 2
  %vm180 = vcmp.eq.s32.totalorder %v178, 0
  %v181 = vxor.u32 %v175, 2147483648
  %v182 = vsel %vm180, %v174, %v181
  %vm183 = vcmp.eq.s32.totalorder %v178, 2
  %v184 = vxor.u32 %v174, 2147483648
  %v185 = vsel %vm183, %v184, %v175
  %v186 = vsel %vm179, %v182, %v185
  %v187 = vsel %vm176, nan, %v186
  %188 = vst [vmem:[%s4] sm:$0xff] %v187
  // Predicated region
  $region18: #{sinusoidal_pos_emb_batched.1} parent=0 // pred_check
    _
  $region19: #{sinusoidal_pos_emb_batched.1} parent=0 // pred_check_branch
    %190 = sbr.rel (0) target = $region21
  $region20: #{sinusoidal_pos_emb_batched.1} parent=0 // pred_region
    _
  $region21: #{sinusoidal_pos_emb_batched.1} parent=0 // pred_fallthru
    _
  // Predicated region
  $region22: #{sinusoidal_pos_emb_batched.1} parent=0 // pred_check
    _
  $region23: #{sinusoidal_pos_emb_batched.1} parent=0 // pred_check_branch
    %192 = sbr.rel (0) target = $region25
  $region24: #{sinusoidal_pos_emb_batched.1} parent=0 // pred_region
    _
  $region25: #{sinusoidal_pos_emb_batched.1} parent=0 // pred_fallthru
    _

</llo_original>
